<compile_context>
chip_gen: v5e
topology: v5e:2x2
jax: 0.10.0
libtpu: 0.0.40
codegen_flags: <defaults>
</compile_context>

<pallas_src>
import functools

import numpy as np
import jax
import jax.numpy as jnp
from jax.experimental import pallas as pl
from jax.experimental.pallas import tpu as pltpu


# ------------------------------ Pallas kernel ------------------------------

def _mode_scale_kernel(scale_ref, x_ref, o_ref):
    """o = x * per-row scale.

    scale_ref : (tile_r, 1) f32 per-row-block scale.
    x_ref     : (tile_r, tile_c) input tile.
    o_ref     : (tile_r, tile_c) output tile (aliased onto the input slab).
    """
    o_ref[...] = (x_ref[...] * scale_ref[...]).astype(o_ref.dtype)


def _choose_tiles(n_rows, n_lanes, itemsize, target_block_bytes=4 * 1024 * 1024):
    """Large, lane-dense, dtype-aware tiles.

    - lane dim: full extent if <= 2048, else 2048 (multiple of 128).
    - row dim: multiple of the dtype sublane packing (8 f32 / 16 bf16 / 32 i8),
      sized so one block is ~4 MiB -> double-buffered in+out ~16 MiB total
      (explicit vmem_limit_bytes is set on the pallas_call).
    - if the resulting grid would be a single block, split one axis so the two
      TensorCores on v7x both get work (no effect on single-TC v5e/v6e).
    """
    sub_min = max(8, 32 // int(itemsize))
    max_lanes = 2048
    tile_c = n_lanes if n_lanes <= max_lanes else max_lanes
    rows = max(sub_min, target_block_bytes // max(1, tile_c * int(itemsize)))
    rows = max(sub_min, (rows // sub_min) * sub_min)
    tile_r = n_rows if n_rows <= rows else rows

    # v7x megacore balance: make sure there is more than one grid block when
    # we can split without violating the (8, 128) block-shape constraint.
    if pl.cdiv(n_rows, tile_r) * pl.cdiv(n_lanes, tile_c) < 2:
        if tile_c % 256 == 0:
            tile_c //= 2
        elif tile_r % (2 * sub_min) == 0:
            tile_r //= 2
    return tile_r, tile_c


@functools.partial(jax.jit, donate_argnums=(0,))
def _mode_dropout_apply(x, chan_scale):
    """x: [B, C, H, W] (donated); chan_scale: [C] f32 per-channel multiplier."""
    B, C, H, W = x.shape
    R, L = B * C, H * W
    tile_r, tile_c = _choose_tiles(R, L, jnp.dtype(x.dtype).itemsize)
    grid_r = pl.cdiv(R, tile_r)
    grid_c = pl.cdiv(L, tile_c)

    # Per-(b, c) row scale (no padding needed: partial last blocks are clipped
    # by Pallas, and the scale is blocked per row-block, not resident).
    row_scale = jnp.broadcast_to(
        chan_scale.astype(jnp.float32)[None, :], (B, C)).reshape(R, 1)

    x2d = x.reshape(R, L)

    y2d = pl.pallas_call(
        _mode_scale_kernel,
        out_shape=jax.ShapeDtypeStruct((R, L), x.dtype),
        grid_spec=pltpu.PrefetchScalarGridSpec(
            num_scalar_prefetch=0,
            grid=(grid_r, grid_c),
            in_specs=[
                # Small per-row-block scale; block index constant across the
                # inner (j) axis, so it is only re-fetched grid_r times.
                pl.BlockSpec((tile_r, 1), lambda i, j: (i, 0)),
                # Lane-dense data tile.
                pl.BlockSpec((tile_r, tile_c), lambda i, j: (i, j)),
            ],
            out_specs=pl.BlockSpec((tile_r, tile_c), lambda i, j: (i, j)),
        ),
        # Scale in place: output reuses the (donated) input slab.
        input_output_aliases={1: 0},
        compiler_params=pltpu.CompilerParams(
            dimension_semantics=("parallel", "parallel"),
            vmem_limit_bytes=48 << 20),
    )(row_scale, x2d)
    return y2d.reshape(B, C, H, W)


# ------------------------------ Module wrapper ------------------------------

class ModeDropoutPallas:
    """JAX/Pallas equivalent of the PyTorch ModeDropout module."""

    def __init__(self, p=0.0, modes=(), seed=0):
        self.p = float(p)
        self.modes = list(modes)
        self.n = int(sum(self.modes))
        self.training = True
        # Deterministic host-side RNG for the per-mode Bernoulli draws
        # (the reference uses np.random inside forward()).
        self._rng = np.random.RandomState(seed)

    def __call__(self, x):
        C = x.shape[1]
        if not (self.training and self.p > 0.0):
            return x                                  # identity, no kernel

        chan_scale = np.ones((C,), dtype=np.float32)
        index = 0
        masked = 0
        for mode in self.modes:
            if self._rng.rand() < self.p:
                # NOTE: `index` intentionally never advanced -- matches the
                # reference implementation exactly.
                chan_scale[index:index + mode] = 0.0
                masked += mode
        if masked == 0:
            return x                                  # nothing dropped -> x*1
        if masked >= self.n:
            # ratio == 0: write-only zeros, skip the HBM read pass entirely.
            return jnp.zeros_like(x)
        ratio = self.n / (self.n - masked)
        chan_scale *= np.float32(ratio)
        return _mode_dropout_apply(x, jnp.asarray(chan_scale))


# ---------------------------------- main ------------------------------------

if __name__ == "__main__":
    key = jax.random.PRNGKey(0)

    B, C, H, W = 2, 4, 16, 16          # C = sum(modes)
    modes = [2, 2]
    p = 0.6                            # RandomState(0): mode0 dropped, mode1 kept
    x = jax.random.normal(key, (B, C, H, W), dtype=jnp.float32)

    # Snapshot the input before the call: x is donated (in-place scale).
    xn = np.asarray(x).copy()

    # Training path exercises the kernel (masking + rescale).
    mod = ModeDropoutPallas(p=p, modes=modes, seed=0)
    mod.training = True
    y = jax.block_until_ready(mod(x))

    # Reference in plain numpy: same deterministic draws, same faithful
    # non-advancing `index` behavior.
    ref_rng = np.random.RandomState(0)
    index, masked = 0, 0
    for mode in modes:
        if ref_rng.rand() < p:
            xn[:, index:index + mode] *= 0.0
            masked += mode
    n = sum(modes)
    ratio = n / (n - masked) if masked < n else 0.0
    xn *= ratio
    assert masked > 0, "test expects at least one dropped mode so the kernel runs"
    np.testing.assert_allclose(np.asarray(y), xn, rtol=1e-6, atol=1e-6)

    # Eval path: identity, short-circuits without launching the kernel.
    # (fresh input: the training-path input was donated)
    x_eval = jax.random.normal(key, (B, C, H, W), dtype=jnp.float32)
    mod_eval = ModeDropoutPallas(p=p, modes=modes, seed=0)
    mod_eval.training = False
    y_eval = jax.block_until_ready(mod_eval(x_eval))
    np.testing.assert_allclose(np.asarray(y_eval), np.asarray(x_eval), rtol=0, atol=0)

    print("KERNEL_OK")
</pallas_src>

<mosaic_0001>
module attributes {stable_mosaic.version = 11 : i64} {
  func.func @_mode_scale_kernel(%arg0: i32, %arg1: i32, %arg2: memref<8x1xf32, #tpu.memory_space<vmem>>, %arg3: memref<8x128xf32, #tpu.memory_space<vmem>>, %arg4: memref<8x128xf32, #tpu.memory_space<vmem>>) attributes {dimension_semantics = [#tpu.dimension_semantics<parallel>, #tpu.dimension_semantics<parallel>], iteration_bounds = array<i64: 1, 2>, scalar_prefetch = 0 : i64, scratch_operands = 0 : i64, tpu.core_type = #tpu.core_type<tc>, window_params = [{transform_indices = @transform_0, window_bounds = array<i64: 8, 1>}, {transform_indices = @transform_1, window_bounds = array<i64: 8, 128>}, {transform_indices = @transform_2, window_bounds = array<i64: 8, 128>}]} {
    %c0 = arith.constant 0 : index
    %c0_0 = arith.constant 0 : index
    %0 = vector.load %arg3[%c0, %c0_0] : memref<8x128xf32, #tpu.memory_space<vmem>>, vector<8x128xf32>
    %c0_1 = arith.constant 0 : index
    %c0_2 = arith.constant 0 : index
    %1 = vector.load %arg2[%c0_1, %c0_2] : memref<8x1xf32, #tpu.memory_space<vmem>>, vector<8x1xf32>
    %2 = vector.broadcast %1 : vector<8x1xf32> to vector<8x128xf32>
    %3 = arith.mulf %0, %2 : vector<8x128xf32>
    %c0_3 = arith.constant 0 : index
    %c0_4 = arith.constant 0 : index
    %4 = vector.load %arg4[%c0_3, %c0_4] : memref<8x128xf32, #tpu.memory_space<vmem>>, vector<8x128xf32>
    tpu.vector_store %arg4[%c0_3, %c0_4], %3 {strides = array<i32>} : memref<8x128xf32, #tpu.memory_space<vmem>>, vector<8x128xf32>,
    return
  }
  func.func @transform_0(%arg0: i32, %arg1: i32) -> (i32, i32) {
    %c0_i32 = arith.constant 0 : i32
    %c0_i32_0 = arith.constant 0 : i32
    return %arg0, %c0_i32 : i32, i32
  }
  func.func @transform_1(%arg0: i32, %arg1: i32) -> (i32, i32) {
    %c0_i32 = arith.constant 0 : i32
    return %arg0, %arg1 : i32, i32
  }
  func.func @transform_2(%arg0: i32, %arg1: i32) -> (i32, i32) {
    %c0_i32 = arith.constant 0 : i32
    return %arg0, %arg1 : i32, i32
  }
}

</mosaic_0001>

<llo_original>
// kernel: _mode_dropout_apply.1
$region0: #{_mode_dropout_apply.1}
  #allocation0 [shape = 'u32[]', space=smem, size = 0x4, offset = 0x4, fixed_abs, tag = 'smem constant byte address 0x4 - core index']
  #allocation1 [shape = 'u32[72,128]{1,0:T(1,128)}', space=vmem, size = 0x9000, scoped, tag = 'internal scratch']
  %s0 = inlined_call_operand.vmem [shape: f32[8,1], index: 0, kind: input, shape index: {}]
  %s1 = inlined_call_operand.vmem [shape: f32[8,256], index: 1, kind: input, shape index: {}, may-alias: {1,2}]
  %s2 = inlined_call_operand.vmem [shape: f32[8,256], index: 2, kind: output, shape index: {}, may-alias: {1,2}]
  %s3 = sld [smem:[#allocation0]]
  $region41: #{_mode_dropout_apply.1} parent=0
    _
  %s5 = ssub.s32 1, %s3
  %s6 = scalar_select 0, %s5, %s3
  loop: start=0, step=1, limit=4
  $region2: #{_mode_dropout_apply.1} parent=0 // loop_pre_header
    _
  $region3: #{_mode_dropout_apply.1} parent=0 // loop_header
    %s8 = sphi 0, %s12
    %p9 = scmp.ge.s32.totalorder %s8, 4
    %s15 = sphi 0, %s27
    %s16 = sphi 0, %s23
    %s17 = sphi 0, %s15
    %s18 = sphi 0, %s16
    %s19 = sphi 0, %s17
    %s20 = sphi 0, %s18
    %s30 = sphi 0, %s32
    %s33 = sphi 0, %s30
    %s34 = sphi 0, %s33
    %s50 = sphi 0, %s34
    %s58 = sphi 0, %s60
    %s61 = sphi 0, %s58
    %s62 = sphi 0, %s61
    %s78 = sphi 0, %s62
    %s86 = sphi 0, %s88
    %s89 = sphi 0, %s86
    %s90 = sphi 0, %s89
    %s106 = sphi 0, %s90
  $region4: #{_mode_dropout_apply.1} parent=0 // loop_header_branch
    %11 = sbr.rel (%p9) target = $region8
  $region5: #{_mode_dropout_apply.1} parent=0 // loop_body
    %s13 = ssub.s32 %s8, 1
    %s14 = ssub.s32 %s8, 2
    %s21 = sadd.s32 1, %s16
    %p22 = scmp.ge.s32.totalorder %s21, 2
    %s23 = scalar_select %p22, 0, %s21
    %s24 = sadd.s32 1, %s15
    %s25 = scalar_select %p22, %s24, %s15
    %p26 = scmp.ge.s32.totalorder %s25, 1
    %s27 = scalar_select %p26, 0, %s25
    %s28 = ssub.s32 %s15, %s27
    %p29 = scmp.eq.s32.totalorder %s28, 0
    %s31 = sadd.s32 %s30, 1
    %s32 = scalar_select %p29, %s30, %s31
    %p35 = pneg %p29
    %p36 = scmp.eq.s32.totalorder %s8, 1
    %p37 = por %p35, %p36
    %p38 = scmp.ne.s32.totalorder %s30, %s33
    %p39 = scmp.eq.s32.totalorder %s8, 0
    %p40 = por %p38, %p39
    %p41 = scmp.ne.s32.totalorder %s30, %s33
    %p42 = scmp.eq.s32.totalorder %s13, 1
    %p43 = por %p41, %p42
    %p44 = scmp.ne.s32.totalorder %s33, %s34
    %p45 = scmp.eq.s32.totalorder %s13, 0
    %p46 = por %p44, %p45
    %p47 = scmp.ne.s32.totalorder %s33, %s34
    %p48 = scmp.eq.s32.totalorder %s14, 1
    %p49 = por %p47, %p48
    %p51 = scmp.ne.s32.totalorder %s34, %s50
    %p52 = scmp.eq.s32.totalorder %s14, 0
    %p53 = por %p51, %p52
    %s54 = ssub.s32 %s15, %s27
    %s55 = ssub.s32 %s16, %s23
    %s56 = sor.u32 %s54, %s55
    %p57 = scmp.eq.s32.totalorder %s56, 0
    %s59 = sadd.s32 %s58, 1
    %s60 = scalar_select %p57, %s58, %s59
    %p63 = pneg %p57
    %p64 = scmp.eq.s32.totalorder %s8, 1
    %p65 = por %p63, %p64
    %p66 = scmp.ne.s32.totalorder %s58, %s61
    %p67 = scmp.eq.s32.totalorder %s8, 0
    %p68 = por %p66, %p67
    %p69 = scmp.ne.s32.totalorder %s58, %s61
    %p70 = scmp.eq.s32.totalorder %s13, 1
    %p71 = por %p69, %p70
    %p72 = scmp.ne.s32.totalorder %s61, %s62
    %p73 = scmp.eq.s32.totalorder %s13, 0
    %p74 = por %p72, %p73
    %p75 = scmp.ne.s32.totalorder %s61, %s62
    %p76 = scmp.eq.s32.totalorder %s14, 1
    %p77 = por %p75, %p76
    %p79 = scmp.ne.s32.totalorder %s62, %s78
    %p80 = scmp.eq.s32.totalorder %s14, 0
    %p81 = por %p79, %p80
    %s82 = ssub.s32 %s15, %s27
    %s83 = ssub.s32 %s16, %s23
    %s84 = sor.u32 %s82, %s83
    %p85 = scmp.eq.s32.totalorder %s84, 0
    %s87 = sadd.s32 %s86, 1
    %s88 = scalar_select %p85, %s86, %s87
    %p91 = pneg %p85
    %p92 = scmp.eq.s32.totalorder %s8, 1
    %p93 = por %p91, %p92
    %p94 = scmp.ne.s32.totalorder %s86, %s89
    %p95 = scmp.eq.s32.totalorder %s8, 0
    %p96 = por %p94, %p95
    %p97 = scmp.ne.s32.totalorder %s86, %s89
    %p98 = scmp.eq.s32.totalorder %s13, 1
    %p99 = por %p97, %p98
    %p100 = scmp.ne.s32.totalorder %s89, %s90
    %p101 = scmp.eq.s32.totalorder %s13, 0
    %p102 = por %p100, %p101
    %p103 = scmp.ne.s32.totalorder %s89, %s90
    %p104 = scmp.eq.s32.totalorder %s14, 1
    %p105 = por %p103, %p104
    %p107 = scmp.ne.s32.totalorder %s90, %s106
    %p108 = scmp.eq.s32.totalorder %s14, 0
    %p109 = por %p107, %p108
    %p110 = scmp.le.s32.totalorder 1, %s8
    %p111 = scmp.lt.s32.totalorder %s8, 3
    %p112 = pnand %p110, %p111
    %p113 = pneg %p112
    // Predicated region
    $region9: #{_mode_dropout_apply.1} parent=5 // pred_check
      _
    $region10: #{_mode_dropout_apply.1} parent=5 // pred_check_branch
      %115 = sbr.rel (%p112) target = $region12
    $region11: #{_mode_dropout_apply.1} parent=5 // pred_region
      %s116 = ssub.s32 %s8, 1
      // Predicated region
      $region13: #{_mode_dropout_apply.1} parent=11 // pred_check
        %p117 = pneg %p46
      $region14: #{_mode_dropout_apply.1} parent=11 // pred_check_branch
        %119 = sbr.rel (%p117) target = $region16
      $region15: #{_mode_dropout_apply.1} parent=11 // pred_region
        %p120 = scmp.lt.s32.totalorder %s17, 0
        %s121 = scalar_select %p120, %s17, 0
        %s122 = smul.addr %s121, 8
        %s123 = scalar_lea.vmem %s0, %s122
      $region16: #{_mode_dropout_apply.1} parent=11 // pred_fallthru
        _
    $region12: #{_mode_dropout_apply.1} parent=5 // pred_fallthru
      _
    %p124 = scmp.lt.s32.totalorder %s8, 2
    // Predicated region
    $region17: #{_mode_dropout_apply.1} parent=5 // pred_check
      %p125 = pneg %p124
    $region18: #{_mode_dropout_apply.1} parent=5 // pred_check_branch
      %127 = sbr.rel (%p125) target = $region20
    $region19: #{_mode_dropout_apply.1} parent=5 // pred_region
      // Predicated region
      $region21: #{_mode_dropout_apply.1} parent=19 // pred_check
        %p128 = pneg %p68
      $region22: #{_mode_dropout_apply.1} parent=19 // pred_check_branch
        %130 = sbr.rel (%p128) target = $region24
      $region23: #{_mode_dropout_apply.1} parent=19 // pred_region
        %p131 = scmp.lt.s32.totalorder %s15, 0
        %s132 = scalar_select %p131, %s15, 0
        %p133 = scmp.lt.s32.totalorder %s16, 1
        %s134 = scalar_select %p133, %s16, 1
        %s135 = smul.addr %s132, 2
        %s136 = sadd.s32 %s134, %s135
        %s137 = smul.addr %s136, 8
        %s138 = scalar_lea.vmem %s1, %s137
      $region24: #{_mode_dropout_apply.1} parent=19 // pred_fallthru
        _
    $region20: #{_mode_dropout_apply.1} parent=5 // pred_fallthru
      _
    %p139 = scmp.le.s32.totalorder 1, %s8
    %p140 = scmp.lt.s32.totalorder %s8, 3
    %p141 = pnand %p139, %p140
    %p142 = pneg %p141
    // Predicated region
    $region25: #{_mode_dropout_apply.1} parent=5 // pred_check
      _
    $region26: #{_mode_dropout_apply.1} parent=5 // pred_check_branch
      %144 = sbr.rel (%p141) target = $region28
    $region27: #{_mode_dropout_apply.1} parent=5 // pred_region
      %s145 = ssub.s32 %s8, 1
      %p146 = scmp.lt.s32.totalorder %s17, 0
      %s147 = scalar_select %p146, %s17, 0
      %s148 = smul.addr %s147, 8
      %s149 = scalar_lea.vmem %s0, %s148
      %p150 = pneg %p46
      %p151 = pneg %p43
      %p152 = scmp.lt.s32.totalorder %s17, 0
      %s153 = scalar_select %p152, %s17, 0
      %p154 = scmp.lt.s32.totalorder %s18, 1
      %s155 = scalar_select %p154, %s18, 1
      %s156 = smul.addr %s153, 2
      %s157 = sadd.s32 %s155, %s156
      %s158 = smul.addr %s157, 8
      %s159 = scalar_lea.vmem %s1, %s158
      %p160 = pneg %p74
      %p161 = pneg %p71
      %p162 = pneg %p102
      %p163 = pneg %p99
      %p164 = scmp.lt.s32.totalorder %s17, 0
      %s165 = scalar_select %p164, %s17, 0
      %p166 = scmp.lt.s32.totalorder %s18, 1
      %s167 = scalar_select %p166, %s18, 1
      %s168 = smul.addr %s165, 2
      %s169 = sadd.s32 %s167, %s168
      %s170 = smul.addr %s169, 8
      %s171 = scalar_lea.vmem %s2, %s170
      %p172 = scmp.lt.s32.totalorder %s17, 0
      %s173 = scalar_select %p172, %s17, 0
      %s174 = smul.addr %s173, 8
      %s175 = scalar_lea.vmem %s0, %s174
      %p176 = scmp.lt.s32.totalorder %s17, 0
      %s177 = scalar_select %p176, %s17, 0
      %p178 = scmp.lt.s32.totalorder %s18, 1
      %s179 = scalar_select %p178, %s18, 1
      %s180 = smul.addr %s177, 2
      %s181 = sadd.s32 %s179, %s180
      %s182 = smul.addr %s181, 8
      %s183 = scalar_lea.vmem %s1, %s182
      %p184 = scmp.lt.s32.totalorder %s17, 0
      %s185 = scalar_select %p184, %s17, 0
      %p186 = scmp.lt.s32.totalorder %s18, 1
      %s187 = scalar_select %p186, %s18, 1
      %s188 = smul.addr %s185, 2
      %s189 = sadd.s32 %s187, %s188
      %s190 = smul.addr %s189, 8
      %s191 = scalar_lea.vmem %s2, %s190
      %v192 = vld [vmem:[%s183] sm:$0xff]
      %v193 = vld [vmem:[%s175] sm:$0xff]
      %195 = vset.pattern.permute.xlu0 0
      %196 = vperm.xlu0 %195, %v193
      %v197 = vpop.permute.xlu0 %196
      %v199 = vmul.f32 %v192, %v197
      %200 = vst [vmem:[%s191] sm:$0xff] %v199
      %p201 = scmp.lt.s32.totalorder %s17, 0
      %s202 = scalar_select %p201, %s17, 0
      %p203 = scmp.lt.s32.totalorder %s18, 1
      %s204 = scalar_select %p203, %s18, 1
      %s205 = smul.addr %s202, 2
      %s206 = sadd.s32 %s204, %s205
      %s207 = smul.addr %s206, 8
      %s208 = scalar_lea.vmem %s2, %s207
      // Predicated region
      $region29: #{_mode_dropout_apply.1} parent=27 // pred_check
        %p209 = pneg %p99
      $region30: #{_mode_dropout_apply.1} parent=27 // pred_check_branch
        %211 = sbr.rel (%p209) target = $region32
      $region31: #{_mode_dropout_apply.1} parent=27 // pred_region
        _
      $region32: #{_mode_dropout_apply.1} parent=27 // pred_fallthru
        _
    $region28: #{_mode_dropout_apply.1} parent=5 // pred_fallthru
      _
    %p212 = scmp.le.s32.totalorder 2, %s8
    // Predicated region
    $region33: #{_mode_dropout_apply.1} parent=5 // pred_check
      %p213 = pneg %p212
    $region34: #{_mode_dropout_apply.1} parent=5 // pred_check_branch
      %215 = sbr.rel (%p213) target = $region36
    $region35: #{_mode_dropout_apply.1} parent=5 // pred_region
      %s216 = ssub.s32 %s8, 2
      // Predicated region
      $region37: #{_mode_dropout_apply.1} parent=35 // pred_check
        %p217 = pneg %p105
      $region38: #{_mode_dropout_apply.1} parent=35 // pred_check_branch
        %219 = sbr.rel (%p217) target = $region40
      $region39: #{_mode_dropout_apply.1} parent=35 // pred_region
        %p220 = scmp.lt.s32.totalorder %s19, 0
        %s221 = scalar_select %p220, %s19, 0
        %p222 = scmp.lt.s32.totalorder %s20, 1
        %s223 = scalar_select %p222, %s20, 1
        %s224 = smul.addr %s221, 2
        %s225 = sadd.s32 %s223, %s224
        %s226 = smul.addr %s225, 8
        %s227 = scalar_lea.vmem %s2, %s226
      $region40: #{_mode_dropout_apply.1} parent=35 // pred_fallthru
        _
    $region36: #{_mode_dropout_apply.1} parent=5 // pred_fallthru
      _
  $region6: #{_mode_dropout_apply.1} parent=0 // loop_footer
    %s12 = sadd.s32 1, %s8
  $region7: #{_mode_dropout_apply.1} parent=0 // loop_footer_branch
    %7 = sbr.rel target = $region3
  $region8: #{_mode_dropout_apply.1} parent=0 // loop_exit
    _

</llo_original>
